<compile_context>
chip_gen: v6e
topology: v6e:2x2x1
jax: 0.10.0
libtpu: 0.0.40
codegen_flags: <defaults>
</compile_context>

<pallas_src>
import functools

import jax
import jax.numpy as jnp
from jax.experimental import pallas as pl
from jax.experimental.pallas import tpu as pltpu

EPS = 1e-5


# --------------------------------------------------------------------------
# Pass 1: per-channel batch statistics + fused per-(N, C) scale / shift.
# --------------------------------------------------------------------------
def stats_kernel(x_ref, y_ref, wg_ref, bg_ref, wb_ref, bb_ref,
                 scale_ref, shift_ref, sum_sc, ssq_sc, *, inv_count):
    n = pl.program_id(0)
    h = pl.program_id(1)

    @pl.when(jnp.logical_and(n == 0, h == 0))
    def _init():
        sum_sc[...] = jnp.zeros_like(sum_sc)
        ssq_sc[...] = jnp.zeros_like(ssq_sc)

    # Per-tile partial sums (bounded live ranges; single traversal of x).
    x = x_ref[...].astype(jnp.float32)                 # (1, C, T)
    sum_sc[...] += jnp.sum(x, axis=2)                  # (1, C)
    ssq_sc[...] += jnp.sum(x * x, axis=2)              # (1, C)

    last = jnp.logical_and(n == pl.num_programs(0) - 1,
                           h == pl.num_programs(1) - 1)

    @pl.when(last)
    def _finalize():
        mean = sum_sc[...] * inv_count                             # (1, C)
        var = ssq_sc[...] * inv_count - mean * mean                # biased var
        inv_std = jax.lax.rsqrt(var + EPS)                         # EUP, once

        # Tiny class-conditional gain/bias matmuls — issued once, not per tile.
        y = y_ref[...].astype(jnp.float32)                         # (N, K)
        gain = 1.0 + jnp.dot(y, wg_ref[...],
                             preferred_element_type=jnp.float32) \
                   + bg_ref[...].astype(jnp.float32)               # (N, C)
        bias = jnp.dot(y, wb_ref[...],
                       preferred_element_type=jnp.float32) \
                   + bb_ref[...].astype(jnp.float32)               # (N, C)

        scale = inv_std * gain                                     # (N, C)
        shift = bias - mean * scale                                # (N, C)
        scale_ref[...] = scale
        shift_ref[...] = shift


# --------------------------------------------------------------------------
# Pass 2: apply  out = x * scale + shift  over lane-dense HW tiles.
# --------------------------------------------------------------------------
def apply_kernel(x_ref, scale_ref, shift_ref, o_ref):
    # x_ref: (1, C, T); scale_ref/shift_ref: (1, C, 1)
    x = x_ref[...].astype(jnp.float32)
    o_ref[...] = (x * scale_ref[...] + shift_ref[...]).astype(o_ref.dtype)


def _pick_hw_tile(hw, target):
    """Largest multiple of 128 that divides hw and is <= target (else hw)."""
    if hw % 128 != 0:
        return hw
    best = 128
    t = 128
    while t <= min(hw, target):
        if hw % t == 0:
            best = t
        t += 128
    return best


def ccbn_forward(x_nchw, y, wg, bg, wb, bb, *, hw_tile_target=512):
    """x_nchw: (N, C, H, W); y: (N, K); wg/wb: (K, C); bg/bb: (C,)."""
    N, C, H, W = x_nchw.shape
    K = y.shape[1]
    HW = H * W
    x = x_nchw.reshape(N, C, HW)

    hw_tile = _pick_hw_tile(HW, hw_tile_target)
    num_hw = HW // hw_tile

    # ---------------- Pass 1: stats + fused scale/shift ----------------
    scale, shift = pl.pallas_call(
        functools.partial(stats_kernel, inv_count=1.0 / float(N * HW)),
        out_shape=(jax.ShapeDtypeStruct((N, C), jnp.float32),
                   jax.ShapeDtypeStruct((N, C), jnp.float32)),
        grid=(N, num_hw),
        in_specs=[
            pl.BlockSpec((1, C, hw_tile), lambda n, h: (n, 0, h)),
            pl.BlockSpec((N, K), lambda n, h: (0, 0)),
            pl.BlockSpec((K, C), lambda n, h: (0, 0)),
            pl.BlockSpec((1, C), lambda n, h: (0, 0)),
            pl.BlockSpec((K, C), lambda n, h: (0, 0)),
            pl.BlockSpec((1, C), lambda n, h: (0, 0)),
        ],
        out_specs=(pl.BlockSpec((N, C), lambda n, h: (0, 0)),
                   pl.BlockSpec((N, C), lambda n, h: (0, 0))),
        scratch_shapes=[pltpu.VMEM((1, C), jnp.float32),
                        pltpu.VMEM((1, C), jnp.float32)],
        compiler_params=pltpu.CompilerParams(
            dimension_semantics=("arbitrary", "arbitrary")),
    )(x, y, wg, bg.reshape(1, C), wb, bb.reshape(1, C))

    # ---------------- Pass 2: pipelined apply ----------------
    out = pl.pallas_call(
        apply_kernel,
        out_shape=jax.ShapeDtypeStruct((N, C, HW), x.dtype),
        grid=(N, num_hw),
        in_specs=[
            pl.BlockSpec((1, C, hw_tile), lambda n, h: (n, 0, h)),
            pl.BlockSpec((1, C, 1), lambda n, h: (n, 0, 0)),
            pl.BlockSpec((1, C, 1), lambda n, h: (n, 0, 0)),
        ],
        out_specs=pl.BlockSpec((1, C, hw_tile), lambda n, h: (n, 0, h)),
        compiler_params=pltpu.CompilerParams(
            dimension_semantics=("parallel", "parallel")),
    )(x, scale.reshape(N, C, 1), shift.reshape(N, C, 1))

    return out.reshape(N, C, H, W)


def ccbn_reference(x, y, wg, bg, wb, bb):
    """Pure-JAX reference matching the PyTorch forward (training mode)."""
    xf = x.astype(jnp.float32)
    m = jnp.mean(xf, axis=(0, 2, 3), keepdims=True)
    var = jnp.mean(xf * xf, axis=(0, 2, 3), keepdims=True) - m * m
    xn = (xf - m) * jax.lax.rsqrt(var + EPS)
    gain = 1.0 + y @ wg + bg                      # (N, C)
    bias = y @ wb + bb
    return xn * gain[:, :, None, None] + bias[:, :, None, None]


if __name__ == "__main__":
    # output_size (channels) = 4, input_size (conditioning dim) = 32
    N, C, H, W = 2, 4, 16, 16
    K = 32

    key = jax.random.PRNGKey(0)
    kx, ky, kwg, kbg, kwb, kbb = jax.random.split(key, 6)

    x = jax.random.normal(kx, (N, C, H, W), dtype=jnp.float32)
    y = jax.random.normal(ky, (N, K), dtype=jnp.float32)

    # Deterministic synthetic Linear params (stored pre-transposed as (K, C)).
    wg = jax.random.normal(kwg, (K, C), dtype=jnp.float32) * 0.05
    bg = jax.random.normal(kbg, (C,), dtype=jnp.float32) * 0.05
    wb = jax.random.normal(kwb, (K, C), dtype=jnp.float32) * 0.05
    bb = jax.random.normal(kbb, (C,), dtype=jnp.float32) * 0.05

    out = ccbn_forward(x, y, wg, bg, wb, bb)
    out = jax.block_until_ready(out)

    ref = ccbn_reference(x, y, wg, bg, wb, bb)
    assert out.shape == (N, C, H, W)
    assert jnp.allclose(out, ref, atol=1e-4, rtol=1e-4), "mismatch vs reference"

    print("KERNEL_OK")
</pallas_src>

<mosaic_0001>
module attributes {stable_mosaic.version = 11 : i64} {
  func.func @stats_kernel(%arg0: i32, %arg1: i32, %arg2: memref<1x4x256xf32, #tpu.memory_space<vmem>>, %arg3: memref<2x32xf32, #tpu.memory_space<vmem>>, %arg4: memref<32x4xf32, #tpu.memory_space<vmem>>, %arg5: memref<1x4xf32, #tpu.memory_space<vmem>>, %arg6: memref<32x4xf32, #tpu.memory_space<vmem>>, %arg7: memref<1x4xf32, #tpu.memory_space<vmem>>, %arg8: memref<2x4xf32, #tpu.memory_space<vmem>>, %arg9: memref<2x4xf32, #tpu.memory_space<vmem>>, %arg10: memref<1x4xf32, #tpu.memory_space<vmem>>, %arg11: memref<1x4xf32, #tpu.memory_space<vmem>>) attributes {dimension_semantics = [#tpu.dimension_semantics<arbitrary>, #tpu.dimension_semantics<arbitrary>], iteration_bounds = array<i64: 2, 1>, scalar_prefetch = 0 : i64, scratch_operands = 2 : i64, tpu.core_type = #tpu.core_type<tc>, window_params = [{transform_indices = @transform_0, window_bounds = array<i64: 1, 4, 256>}, {pipeline_mode = #tpu.pipeline_mode<synchronous>, transform_indices = @transform_1, window_bounds = array<i64: 2, 32>}, {pipeline_mode = #tpu.pipeline_mode<synchronous>, transform_indices = @transform_2, window_bounds = array<i64: 32, 4>}, {pipeline_mode = #tpu.pipeline_mode<synchronous>, transform_indices = @transform_3, window_bounds = array<i64: 1, 4>}, {pipeline_mode = #tpu.pipeline_mode<synchronous>, transform_indices = @transform_4, window_bounds = array<i64: 32, 4>}, {pipeline_mode = #tpu.pipeline_mode<synchronous>, transform_indices = @transform_5, window_bounds = array<i64: 1, 4>}, {pipeline_mode = #tpu.pipeline_mode<synchronous>, transform_indices = @transform_6, window_bounds = array<i64: 2, 4>}, {pipeline_mode = #tpu.pipeline_mode<synchronous>, transform_indices = @transform_7, window_bounds = array<i64: 2, 4>}]} {
    %c0_i32 = arith.constant 0 : i32
    %0 = arith.cmpi eq, %arg0, %c0_i32 : i32
    %c0_i32_0 = arith.constant 0 : i32
    %1 = arith.cmpi eq, %arg1, %c0_i32_0 : i32
    %2 = arith.andi %0, %1 : i1
    %3 = arith.extui %2 : i1 to i32
    %c0_i32_1 = arith.constant 0 : i32
    %4 = arith.cmpi ne, %3, %c0_i32_1 : i32
    scf.if %4 {
      %cst_15 = arith.constant 0.000000e+00 : f32
      %20 = vector.broadcast %cst_15 : f32 to vector<1x4xf32>
      %c0_16 = arith.constant 0 : index
      %c0_17 = arith.constant 0 : index
      %21 = vector.load %arg10[%c0_16, %c0_17] : memref<1x4xf32, #tpu.memory_space<vmem>>, vector<1x4xf32>
      tpu.vector_store %arg10[%c0_16, %c0_17], %20 {strides = array<i32>} : memref<1x4xf32, #tpu.memory_space<vmem>>, vector<1x4xf32>,
      %cst_18 = arith.constant 0.000000e+00 : f32
      %22 = vector.broadcast %cst_18 : f32 to vector<1x4xf32>
      %c0_19 = arith.constant 0 : index
      %c0_20 = arith.constant 0 : index
      %23 = vector.load %arg11[%c0_19, %c0_20] : memref<1x4xf32, #tpu.memory_space<vmem>>, vector<1x4xf32>
      tpu.vector_store %arg11[%c0_19, %c0_20], %22 {strides = array<i32>} : memref<1x4xf32, #tpu.memory_space<vmem>>, vector<1x4xf32>,
    } else {
    }
    %c0 = arith.constant 0 : index
    %c0_2 = arith.constant 0 : index
    %c0_3 = arith.constant 0 : index
    %5 = vector.load %arg2[%c0, %c0_2, %c0_3] : memref<1x4x256xf32, #tpu.memory_space<vmem>>, vector<1x4x256xf32>
    %c0_4 = arith.constant 0 : index
    %c0_5 = arith.constant 0 : index
    %6 = vector.load %arg10[%c0_4, %c0_5] : memref<1x4xf32, #tpu.memory_space<vmem>>, vector<1x4xf32>
    %cst = arith.constant dense<0.000000e+00> : vector<1x4xf32>
    %7 = vector.multi_reduction <add>, %5, %cst [2] : vector<1x4x256xf32> to vector<1x4xf32>
    %8 = arith.addf %6, %7 : vector<1x4xf32>
    %c0_6 = arith.constant 0 : index
    %c0_7 = arith.constant 0 : index
    %9 = vector.load %arg10[%c0_6, %c0_7] : memref<1x4xf32, #tpu.memory_space<vmem>>, vector<1x4xf32>
    tpu.vector_store %arg10[%c0_6, %c0_7], %8 {strides = array<i32>} : memref<1x4xf32, #tpu.memory_space<vmem>>, vector<1x4xf32>,
    %c0_8 = arith.constant 0 : index
    %c0_9 = arith.constant 0 : index
    %10 = vector.load %arg11[%c0_8, %c0_9] : memref<1x4xf32, #tpu.memory_space<vmem>>, vector<1x4xf32>
    %11 = arith.mulf %5, %5 : vector<1x4x256xf32>
    %cst_10 = arith.constant dense<0.000000e+00> : vector<1x4xf32>
    %12 = vector.multi_reduction <add>, %11, %cst_10 [2] : vector<1x4x256xf32> to vector<1x4xf32>
    %13 = arith.addf %10, %12 : vector<1x4xf32>
    %c0_11 = arith.constant 0 : index
    %c0_12 = arith.constant 0 : index
    %14 = vector.load %arg11[%c0_11, %c0_12] : memref<1x4xf32, #tpu.memory_space<vmem>>, vector<1x4xf32>
    tpu.vector_store %arg11[%c0_11, %c0_12], %13 {strides = array<i32>} : memref<1x4xf32, #tpu.memory_space<vmem>>, vector<1x4xf32>,
    %c1_i32 = arith.constant 1 : i32
    %15 = arith.cmpi eq, %arg0, %c1_i32 : i32
    %c0_i32_13 = arith.constant 0 : i32
    %16 = arith.cmpi eq, %arg1, %c0_i32_13 : i32
    %17 = arith.andi %15, %16 : i1
    %18 = arith.extui %17 : i1 to i32
    %c0_i32_14 = arith.constant 0 : i32
    %19 = arith.cmpi ne, %18, %c0_i32_14 : i32
    scf.if %19 {
      %c0_15 = arith.constant 0 : index
      %c0_16 = arith.constant 0 : index
      %20 = vector.load %arg10[%c0_15, %c0_16] : memref<1x4xf32, #tpu.memory_space<vmem>>, vector<1x4xf32>
      %cst_17 = arith.constant 0.001953125 : f32
      %21 = vector.broadcast %cst_17 : f32 to vector<1x4xf32>
      %22 = arith.mulf %20, %21 : vector<1x4xf32>
      %c0_18 = arith.constant 0 : index
      %c0_19 = arith.constant 0 : index
      %23 = vector.load %arg11[%c0_18, %c0_19] : memref<1x4xf32, #tpu.memory_space<vmem>>, vector<1x4xf32>
      %cst_20 = arith.constant 0.001953125 : f32
      %24 = vector.broadcast %cst_20 : f32 to vector<1x4xf32>
      %25 = arith.mulf %23, %24 : vector<1x4xf32>
      %26 = arith.mulf %22, %22 : vector<1x4xf32>
      %27 = arith.subf %25, %26 : vector<1x4xf32>
      %cst_21 = arith.constant 9.99999974E-6 : f32
      %28 = vector.broadcast %cst_21 : f32 to vector<1x4xf32>
      %29 = arith.addf %27, %28 : vector<1x4xf32>
      %30 = math.rsqrt %29 : vector<1x4xf32>
      %c0_22 = arith.constant 0 : index
      %c0_23 = arith.constant 0 : index
      %31 = vector.load %arg3[%c0_22, %c0_23] : memref<2x32xf32, #tpu.memory_space<vmem>>, vector<2x32xf32>
      %c0_24 = arith.constant 0 : index
      %c0_25 = arith.constant 0 : index
      %32 = vector.load %arg4[%c0_24, %c0_25] : memref<32x4xf32, #tpu.memory_space<vmem>>, vector<32x4xf32>
      %cst_26 = arith.constant dense<0.000000e+00> : vector<2x4xf32>
      %33 = tpu.matmul %31, %32, %cst_26 {dimension_numbers = #tpu.dot_dimension_numbers<[1], [0], [0], [1], [0, 0, 1, 1], [], []>} : vector<2x32xf32>, vector<32x4xf32>, vector<2x4xf32> -> vector<2x4xf32>
      %cst_27 = arith.constant 1.000000e+00 : f32
      %34 = vector.broadcast %cst_27 : f32 to vector<2x4xf32>
      %35 = arith.addf %34, %33 : vector<2x4xf32>
      %c0_28 = arith.constant 0 : index
      %c0_29 = arith.constant 0 : index
      %36 = vector.load %arg5[%c0_28, %c0_29] : memref<1x4xf32, #tpu.memory_space<vmem>>, vector<1x4xf32>
      %37 = vector.broadcast %36 : vector<1x4xf32> to vector<2x4xf32>
      %38 = arith.addf %35, %37 : vector<2x4xf32>
      %c0_30 = arith.constant 0 : index
      %c0_31 = arith.constant 0 : index
      %39 = vector.load %arg6[%c0_30, %c0_31] : memref<32x4xf32, #tpu.memory_space<vmem>>, vector<32x4xf32>
      %cst_32 = arith.constant dense<0.000000e+00> : vector<2x4xf32>
      %40 = tpu.matmul %31, %39, %cst_32 {dimension_numbers = #tpu.dot_dimension_numbers<[1], [0], [0], [1], [0, 0, 1, 1], [], []>} : vector<2x32xf32>, vector<32x4xf32>, vector<2x4xf32> -> vector<2x4xf32>
      %c0_33 = arith.constant 0 : index
      %c0_34 = arith.constant 0 : index
      %41 = vector.load %arg7[%c0_33, %c0_34] : memref<1x4xf32, #tpu.memory_space<vmem>>, vector<1x4xf32>
      %42 = vector.broadcast %41 : vector<1x4xf32> to vector<2x4xf32>
      %43 = arith.addf %40, %42 : vector<2x4xf32>
      %44 = vector.broadcast %30 : vector<1x4xf32> to vector<2x4xf32>
      %45 = arith.mulf %44, %38 : vector<2x4xf32>
      %46 = vector.broadcast %22 : vector<1x4xf32> to vector<2x4xf32>
      %47 = arith.mulf %46, %45 : vector<2x4xf32>
      %48 = arith.subf %43, %47 : vector<2x4xf32>
      %c0_35 = arith.constant 0 : index
      %c0_36 = arith.constant 0 : index
      %49 = vector.load %arg8[%c0_35, %c0_36] : memref<2x4xf32, #tpu.memory_space<vmem>>, vector<2x4xf32>
      tpu.vector_store %arg8[%c0_35, %c0_36], %45 {strides = array<i32>} : memref<2x4xf32, #tpu.memory_space<vmem>>, vector<2x4xf32>,
      %c0_37 = arith.constant 0 : index
      %c0_38 = arith.constant 0 : index
      %50 = vector.load %arg9[%c0_37, %c0_38] : memref<2x4xf32, #tpu.memory_space<vmem>>, vector<2x4xf32>
      tpu.vector_store %arg9[%c0_37, %c0_38], %48 {strides = array<i32>} : memref<2x4xf32, #tpu.memory_space<vmem>>, vector<2x4xf32>,
    } else {
    }
    return
  }
  func.func @transform_0(%arg0: i32, %arg1: i32) -> (i32, i32, i32) {
    %c0_i32 = arith.constant 0 : i32
    %c0_i32_0 = arith.constant 0 : i32
    return %arg0, %c0_i32, %arg1 : i32, i32, i32
  }
  func.func @transform_1(%arg0: i32, %arg1: i32) -> (i32, i32) {
    %c0_i32 = arith.constant 0 : i32
    %c0_i32_0 = arith.constant 0 : i32
    %c0_i32_1 = arith.constant 0 : i32
    return %c0_i32, %c0_i32_0 : i32, i32
  }
  func.func @transform_2(%arg0: i32, %arg1: i32) -> (i32, i32) {
    %c0_i32 = arith.constant 0 : i32
    %c0_i32_0 = arith.constant 0 : i32
    %c0_i32_1 = arith.constant 0 : i32
    return %c0_i32, %c0_i32_0 : i32, i32
  }
  func.func @transform_3(%arg0: i32, %arg1: i32) -> (i32, i32) {
    %c0_i32 = arith.constant 0 : i32
    %c0_i32_0 = arith.constant 0 : i32
    %c0_i32_1 = arith.constant 0 : i32
    return %c0_i32, %c0_i32_0 : i32, i32
  }
  func.func @transform_4(%arg0: i32, %arg1: i32) -> (i32, i32) {
    %c0_i32 = arith.constant 0 : i32
    %c0_i32_0 = arith.constant 0 : i32
    %c0_i32_1 = arith.constant 0 : i32
    return %c0_i32, %c0_i32_0 : i32, i32
  }
  func.func @transform_5(%arg0: i32, %arg1: i32) -> (i32, i32) {
    %c0_i32 = arith.constant 0 : i32
    %c0_i32_0 = arith.constant 0 : i32
    %c0_i32_1 = arith.constant 0 : i32
    return %c0_i32, %c0_i32_0 : i32, i32
  }
  func.func @transform_6(%arg0: i32, %arg1: i32) -> (i32, i32) {
    %c0_i32 = arith.constant 0 : i32
    %c0_i32_0 = arith.constant 0 : i32
    %c0_i32_1 = arith.constant 0 : i32
    return %c0_i32, %c0_i32_0 : i32, i32
  }
  func.func @transform_7(%arg0: i32, %arg1: i32) -> (i32, i32) {
    %c0_i32 = arith.constant 0 : i32
    %c0_i32_0 = arith.constant 0 : i32
    %c0_i32_1 = arith.constant 0 : i32
    return %c0_i32, %c0_i32_0 : i32, i32
  }
}

</mosaic_0001>

<llo_original>
// kernel: tpu_custom_call.1
$region0: #{tpu_custom_call.1}
  #allocation0 [shape = 'u32[]', space=smem, size = 0x4, offset = 0x4, fixed_abs, tag = 'smem constant byte address 0x4 - core index']
  #allocation1 [shape = 'u32[144,128]{1,0:T(1,128)}', space=vmem, size = 0x12000, scoped, tag = 'internal scratch']
  #allocation2 [shape = 'f32[1,4]{1,0:T(1,128)}', space=vmem, size = 0x200, scoped, tag = 'scratch operand']
  #allocation3 [shape = 'f32[1,4]{1,0:T(1,128)}', space=vmem, size = 0x200, scoped, tag = 'scratch operand']
  %s0 = inlined_call_operand.vmem [shape: f32[2,4,256], index: 0, kind: input, shape index: {}]
  %s1 = inlined_call_operand.vmem [shape: f32[2,32], index: 1, kind: input, shape index: {}]
  %s2 = inlined_call_operand.vmem [shape: f32[32,4], index: 2, kind: input, shape index: {}]
  %s3 = inlined_call_operand.vmem [shape: f32[1,4], index: 3, kind: input, shape index: {}]
  %s4 = inlined_call_operand.vmem [shape: f32[32,4], index: 4, kind: input, shape index: {}]
  %s5 = inlined_call_operand.vmem [shape: f32[1,4], index: 5, kind: input, shape index: {}]
  %s6 = inlined_call_operand.hbm [shape: f32[2,4], index: 6, kind: output, shape index: {0}]
  %s7 = inlined_call_operand.hbm [shape: f32[2,4], index: 7, kind: output, shape index: {1}]
  %8 = xla_tuple %s6, %s7
  %s9 = sld [smem:[#allocation0]]
  $region73: #{tpu_custom_call.1} parent=0
    _
  %s11 = ssub.s32 1, %s9
  %s12 = scalar_select 0, %s11, %s9
  $region1: #{tpu_custom_call.1} parent=0
    #allocation4 [shape = 'u8[1024]{0}', space=vmem, size = 0x400, scoped, tag = 'output window, operand 0, single buffered']
    #allocation5 [shape = 's32[2]{0}', space=sflag, size = 0x8, scoped, tag = 'scoped memory for tpu_custom_call.1']
    #allocation6 [shape = 'u8[1024]{0}', space=vmem, size = 0x400, scoped, tag = 'output window, operand 1, single buffered']
    #allocation7 [shape = 's32[1]{0}', space=sflag, size = 0x4, scoped, tag = 'scoped memory for tpu_custom_call.1']
    %13 = vsyncpa [#allocation5], 0
    %14 = vsyncpa [#allocation7], 0
    loop: start=0, step=1, limit=4
    $region2: #{tpu_custom_call.1} parent=1 // loop_pre_header
      _
    $region3: #{tpu_custom_call.1} parent=1 // loop_header
      %s16 = sphi 0, %s20
      %p17 = scmp.ge.s32.totalorder %s16, 4
      %s23 = sphi 0, %s35
      %s24 = sphi 0, %s31
      %s25 = sphi 0, %s23
      %s26 = sphi 0, %s24
      %s27 = sphi 0, %s25
      %s28 = sphi 0, %s26
      %s40 = sphi 0, %s42
      %s43 = sphi 0, %s40
      %s44 = sphi 0, %s43
      %s60 = sphi 0, %s44
      %s64 = sphi 0, %s64
      %s66 = sphi 0, %s64
      %s67 = sphi 0, %s66
      %s81 = sphi 0, %s67
      %s85 = sphi 0, %s85
      %s87 = sphi 0, %s85
      %s88 = sphi 0, %s87
      %s102 = sphi 0, %s88
      %s106 = sphi 0, %s106
      %s108 = sphi 0, %s106
      %s109 = sphi 0, %s108
      %s123 = sphi 0, %s109
      %s127 = sphi 0, %s127
      %s129 = sphi 0, %s127
      %s130 = sphi 0, %s129
      %s144 = sphi 0, %s130
      %s148 = sphi 0, %s148
      %s150 = sphi 0, %s148
      %s151 = sphi 0, %s150
      %s165 = sphi 0, %s151
      %s169 = sphi 0, %s169
      %s171 = sphi 0, %s169
      %s172 = sphi 0, %s171
      %s186 = sphi 0, %s172
      %s190 = sphi 0, %s190
      %s192 = sphi 0, %s190
      %s193 = sphi 0, %s192
      %s207 = sphi 0, %s193
    $region4: #{tpu_custom_call.1} parent=1 // loop_header_branch
      %19 = sbr.rel (%p17) target = $region8
    $region5: #{tpu_custom_call.1} parent=1 // loop_body
      %s21 = ssub.s32 %s16, 1
      %s22 = ssub.s32 %s16, 2
      %s29 = sadd.s32 1, %s24
      %p30 = scmp.ge.s32.totalorder %s29, 1
      %s31 = scalar_select %p30, 0, %s29
      %s32 = sadd.s32 1, %s23
      %s33 = scalar_select %p30, %s32, %s23
      %p34 = scmp.ge.s32.totalorder %s33, 2
      %s35 = scalar_select %p34, 0, %s33
      %s36 = ssub.s32 %s23, %s35
      %s37 = ssub.s32 %s24, %s31
      %s38 = sor.u32 %s36, %s37
      %p39 = scmp.eq.s32.totalorder %s38, 0
      %s41 = sadd.s32 %s40, 1
      %s42 = scalar_select %p39, %s40, %s41
      %p45 = pneg %p39
      %p46 = scmp.eq.s32.totalorder %s16, 1
      %p47 = por %p45, %p46
      %p48 = scmp.ne.s32.totalorder %s40, %s43
      %p49 = scmp.eq.s32.totalorder %s16, 0
      %p50 = por %p48, %p49
      %p51 = scmp.ne.s32.totalorder %s40, %s43
      %p52 = scmp.eq.s32.totalorder %s21, 1
      %p53 = por %p51, %p52
      %p54 = scmp.ne.s32.totalorder %s43, %s44
      %p55 = scmp.eq.s32.totalorder %s21, 0
      %p56 = por %p54, %p55
      %p57 = scmp.ne.s32.totalorder %s43, %s44
      %p58 = scmp.eq.s32.totalorder %s22, 1
      %p59 = por %p57, %p58
      %p61 = scmp.ne.s32.totalorder %s44, %s60
      %p62 = scmp.eq.s32.totalorder %s22, 0
      %p63 = por %p61, %p62
      %s65 = sadd.s32 %s64, 1
      %p68 = scmp.eq.s32.totalorder %s16, 1
      %p69 = scmp.ne.s32.totalorder %s64, %s66
      %p70 = scmp.eq.s32.totalorder %s16, 0
      %p71 = por %p69, %p70
      %p72 = scmp.ne.s32.totalorder %s64, %s66
      %p73 = scmp.eq.s32.totalorder %s21, 1
      %p74 = por %p72, %p73
      %p75 = scmp.ne.s32.totalorder %s66, %s67
      %p76 = scmp.eq.s32.totalorder %s21, 0
      %p77 = por %p75, %p76
      %p78 = scmp.ne.s32.totalorder %s66, %s67
      %p79 = scmp.eq.s32.totalorder %s22, 1
      %p80 = por %p78, %p79
      %p82 = scmp.ne.s32.totalorder %s67, %s81
      %p83 = scmp.eq.s32.totalorder %s22, 0
      %p84 = por %p82, %p83
      %s86 = sadd.s32 %s85, 1
      %p89 = scmp.eq.s32.totalorder %s16, 1
      %p90 = scmp.ne.s32.totalorder %s85, %s87
      %p91 = scmp.eq.s32.totalorder %s16, 0
      %p92 = por %p90, %p91
      %p93 = scmp.ne.s32.totalorder %s85, %s87
      %p94 = scmp.eq.s32.totalorder %s21, 1
      %p95 = por %p93, %p94
      %p96 = scmp.ne.s32.totalorder %s87, %s88
      %p97 = scmp.eq.s32.totalorder %s21, 0
      %p98 = por %p96, %p97
      %p99 = scmp.ne.s32.totalorder %s87, %s88
      %p100 = scmp.eq.s32.totalorder %s22, 1
      %p101 = por %p99, %p100
      %p103 = scmp.ne.s32.totalorder %s88, %s102
      %p104 = scmp.eq.s32.totalorder %s22, 0
      %p105 = por %p103, %p104
      %s107 = sadd.s32 %s106, 1
      %p110 = scmp.eq.s32.totalorder %s16, 1
      %p111 = scmp.ne.s32.totalorder %s106, %s108
      %p112 = scmp.eq.s32.totalorder %s16, 0
      %p113 = por %p111, %p112
      %p114 = scmp.ne.s32.totalorder %s106, %s108
      %p115 = scmp.eq.s32.totalorder %s21, 1
      %p116 = por %p114, %p115
      %p117 = scmp.ne.s32.totalorder %s108, %s109
      %p118 = scmp.eq.s32.totalorder %s21, 0
      %p119 = por %p117, %p118
      %p120 = scmp.ne.s32.totalorder %s108, %s109
      %p121 = scmp.eq.s32.totalorder %s22, 1
      %p122 = por %p120, %p121
      %p124 = scmp.ne.s32.totalorder %s109, %s123
      %p125 = scmp.eq.s32.totalorder %s22, 0
      %p126 = por %p124, %p125
      %s128 = sadd.s32 %s127, 1
      %p131 = scmp.eq.s32.totalorder %s16, 1
      %p132 = scmp.ne.s32.totalorder %s127, %s129
      %p133 = scmp.eq.s32.totalorder %s16, 0
      %p134 = por %p132, %p133
      %p135 = scmp.ne.s32.totalorder %s127, %s129
      %p136 = scmp.eq.s32.totalorder %s21, 1
      %p137 = por %p135, %p136
      %p138 = scmp.ne.s32.totalorder %s129, %s130
      %p139 = scmp.eq.s32.totalorder %s21, 0
      %p140 = por %p138, %p139
      %p141 = scmp.ne.s32.totalorder %s129, %s130
      %p142 = scmp.eq.s32.totalorder %s22, 1
      %p143 = por %p141, %p142
      %p145 = scmp.ne.s32.totalorder %s130, %s144
      %p146 = scmp.eq.s32.totalorder %s22, 0
      %p147 = por %p145, %p146
      %s149 = sadd.s32 %s148, 1
      %p152 = scmp.eq.s32.totalorder %s16, 1
      %p153 = scmp.ne.s32.totalorder %s148, %s150
      %p154 = scmp.eq.s32.totalorder %s16, 0
      %p155 = por %p153, %p154
      %p156 = scmp.ne.s32.totalorder %s148, %s150
      %p157 = scmp.eq.s32.totalorder %s21, 1
      %p158 = por %p156, %p157
      %p159 = scmp.ne.s32.totalorder %s150, %s151
      %p160 = scmp.eq.s32.totalorder %s21, 0
      %p161 = por %p159, %p160
      %p162 = scmp.ne.s32.totalorder %s150, %s151
      %p163 = scmp.eq.s32.totalorder %s22, 1
      %p164 = por %p162, %p163
      %p166 = scmp.ne.s32.totalorder %s151, %s165
      %p167 = scmp.eq.s32.totalorder %s22, 0
      %p168 = por %p166, %p167
      %s170 = sadd.s32 %s169, 1
      %p173 = scmp.eq.s32.totalorder %s16, 1
      %p174 = scmp.ne.s32.totalorder %s169, %s171
      %p175 = scmp.eq.s32.totalorder %s16, 0
      %p176 = por %p174, %p175
      %p177 = scmp.ne.s32.totalorder %s169, %s171
      %p178 = scmp.eq.s32.totalorder %s21, 1
      %p179 = por %p177, %p178
      %p180 = scmp.ne.s32.totalorder %s171, %s172
      %p181 = scmp.eq.s32.totalorder %s21, 0
      %p182 = por %p180, %p181
      %p183 = scmp.ne.s32.totalorder %s171, %s172
      %p184 = scmp.eq.s32.totalorder %s22, 1
      %p185 = por %p183, %p184
      %p187 = scmp.ne.s32.totalorder %s172, %s186
      %p188 = scmp.eq.s32.totalorder %s22, 0
      %p189 = por %p187, %p188
      %s191 = sadd.s32 %s190, 1
      %p194 = scmp.eq.s32.totalorder %s16, 1
      %p195 = scmp.ne.s32.totalorder %s190, %s192
      %p196 = scmp.eq.s32.totalorder %s16, 0
      %p197 = por %p195, %p196
      %p198 = scmp.ne.s32.totalorder %s190, %s192
      %p199 = scmp.eq.s32.totalorder %s21, 1
      %p200 = por %p198, %p199
      %p201 = scmp.ne.s32.totalorder %s192, %s193
      %p202 = scmp.eq.s32.totalorder %s21, 0
      %p203 = por %p201, %p202
      %p204 = scmp.ne.s32.totalorder %s192, %s193
      %p205 = scmp.eq.s32.totalorder %s22, 1
      %p206 = por %p204, %p205
      %p208 = scmp.ne.s32.totalorder %s193, %s207
      %p209 = scmp.eq.s32.totalorder %s22, 0
      %p210 = por %p208, %p209
      %p211 = scmp.le.s32.totalorder 1, %s16
      %p212 = scmp.lt.s32.totalorder %s16, 3
      %p213 = pnand %p211, %p212
      %p214 = pneg %p213
      // Predicated region
      $region9: #{tpu_custom_call.1} parent=5 // pred_check
        _
      $region10: #{tpu_custom_call.1} parent=5 // pred_check_branch
        %216 = sbr.rel (%p213) target = $region12
      $region11: #{tpu_custom_call.1} parent=5 // pred_region
        %s217 = ssub.s32 %s16, 1
        // Predicated region
        $region13: #{tpu_custom_call.1} parent=11 // pred_check
          %p218 = pneg %p77
        $region14: #{tpu_custom_call.1} parent=11 // pred_check_branch
          %220 = sbr.rel (%p218) target = $region16
        $region15: #{tpu_custom_call.1} parent=11 // pred_region
          _
        $region16: #{tpu_custom_call.1} parent=11 // pred_fallthru
          _
        // Predicated region
        $region17: #{tpu_custom_call.1} parent=11 // pred_check
          %p221 = pneg %p98
        $region18: #{tpu_custom_call.1} parent=11 // pred_check_branch
          %223 = sbr.rel (%p221) target = $region20
        $region19: #{tpu_custom_call.1} parent=11 // pred_region
          _
        $region20: #{tpu_custom_call.1} parent=11 // pred_fallthru
          _
        // Predicated region
        $region21: #{tpu_custom_call.1} parent=11 // pred_check
          %p224 = pneg %p119
        $region22: #{tpu_custom_call.1} parent=11 // pred_check_branch
          %226 = sbr.rel (%p224) target = $region24
        $region23: #{tpu_custom_call.1} parent=11 // pred_region
          _
        $region24: #{tpu_custom_call.1} parent=11 // pred_fallthru
          _
        // Predicated region
        $region25: #{tpu_custom_call.1} parent=11 // pred_check
          %p227 = pneg %p140
        $region26: #{tpu_custom_call.1} parent=11 // pred_check_branch
          %229 = sbr.rel (%p227) target = $region28
        $region27: #{tpu_custom_call.1} parent=11 // pred_region
          _
        $region28: #{tpu_custom_call.1} parent=11 // pred_fallthru
          _
        // Predicated region
        $region29: #{tpu_custom_call.1} parent=11 // pred_check
          %p230 = pneg %p161
        $region30: #{tpu_custom_call.1} parent=11 // pred_check_branch
          %232 = sbr.rel (%p230) target = $region32
        $region31: #{tpu_custom_call.1} parent=11 // pred_region
          _
        $region32: #{tpu_custom_call.1} parent=11 // pred_fallthru
          _
      $region12: #{tpu_custom_call.1} parent=5 // pred_fallthru
        _
      %p233 = scmp.lt.s32.totalorder %s16, 2
      // Predicated region
      $region33: #{tpu_custom_call.1} parent=5 // pred_check
        %p234 = pneg %p233
      $region34: #{tpu_custom_call.1} parent=5 // pred_check_branch
        %236 = sbr.rel (%p234) target = $region36
      $region35: #{tpu_custom_call.1} parent=5 // pred_region
        // Predicated region
        $region37: #{tpu_custom_call.1} parent=35 // pred_check
          %p237 = pneg %p50
        $region38: #{tpu_custom_call.1} parent=35 // pred_check_branch
          %239 = sbr.rel (%p237) target = $region40
        $region39: #{tpu_custom_call.1} parent=35 // pred_region
          %s240 = smul.u32 2, %s24
          %p241 = scmp.lt.s32.totalorder %s23, 1
          %s242 = scalar_select %p241, %s23, 1
          %p243 = scmp.lt.s32.totalorder %s240, 1
          %s244 = scalar_select %p243, %s240, 1
          %s245 = smul.addr %s242, 2
          %s246 = sadd.s32 %s244, %s245
          %s247 = smul.addr %s246, 4
          %s248 = scalar_lea.vmem %s0, %s247
          %s249 = smul.u32 2, %s24
        $region40: #{tpu_custom_call.1} parent=35 // pred_fallthru
          _
      $region36: #{tpu_custom_call.1} parent=5 // pred_fallthru
        _
      %p250 = scmp.le.s32.totalorder 1, %s16
      %p251 = scmp.lt.s32.totalorder %s16, 3
      %p252 = pnand %p250, %p251
      %p253 = pneg %p252
      // Predicated region
      $region41: #{tpu_custom_call.1} parent=5 // pred_check
        _
      $region42: #{tpu_custom_call.1} parent=5 // pred_check_branch
        %255 = sbr.rel (%p252) target = $region44
      $region43: #{tpu_custom_call.1} parent=5 // pred_region
        %s256 = ssub.s32 %s16, 1
        %s257 = smul.u32 2, %s26
        %p258 = scmp.lt.s32.totalorder %s25, 1
        %s259 = scalar_select %p258, %s25, 1
        %p260 = scmp.lt.s32.totalorder %s257, 1
        %s261 = scalar_select %p260, %s257, 1
        %s262 = smul.addr %s259, 2
        %s263 = sadd.s32 %s261, %s262
        %s264 = smul.addr %s263, 4
        %s265 = scalar_lea.vmem %s0, %s264
        %p266 = pneg %p56
        %p267 = pneg %p53
        %p268 = pneg %p77
        %p269 = pneg %p74
        %p270 = pneg %p98
        %p271 = pneg %p95
        %p272 = pneg %p119
        %p273 = pneg %p116
        %p274 = pneg %p140
        %p275 = pneg %p137
        %p276 = pneg %p161
        %p277 = pneg %p158
        %p278 = pneg %p182
        %p279 = pneg %p179
        %p280 = pneg %p203
        %p281 = pneg %p200
        %s282 = smul.u32 2, %s26
        %p283 = scmp.lt.s32.totalorder %s25, 1
        %s284 = scalar_select %p283, %s25, 1
        %p285 = scmp.lt.s32.totalorder %s282, 1
        %s286 = scalar_select %p285, %s282, 1
        %s287 = smul.addr %s284, 2
        %s288 = sadd.s32 %s286, %s287
        %s289 = smul.addr %s288, 4
        %s290 = scalar_lea.vmem %s0, %s289
        %s291 = smul.u32 2, %s26
        %p292 = scmp.eq.s32.totalorder %s25, 0
        %p293 = scmp.eq.s32.totalorder %s26, 0
        %p294 = pnand %p292, %p293
        %p295 = pneg %p294
        // Predicated region
        $region45: #{tpu_custom_call.1} parent=43 // pred_check
          _
        $region46: #{tpu_custom_call.1} parent=43 // pred_check_branch
          %297 = sbr.rel (%p294) target = $region48
        $region47: #{tpu_custom_call.1} parent=43 // pred_region
          %vm298 = vcmask 24576
          %299 = vst.msk [vmem:[#allocation2] sm:$0x1] %vm298, 0.0
          %300 = vst.msk [vmem:[#allocation3] sm:$0x1] %vm298, 0.0
        $region48: #{tpu_custom_call.1} parent=43 // pred_fallthru
          _
        %v301 = vld [vmem:[%s290] sm:$0xff]
        %v302 = vld [vmem:[#allocation2] sm:$0x1]
        %v304 = vcombine.high %v301, %v301
        %vm306 = vcmask 1043456
        %v307 = vsel %vm306, %v301, 0.0
        %v308 = vsel %vm306, %v304, 0.0
        %v309 = vadd.f32 %v307, %v308
        %310 = vadd.xlane.f32.xlu0 %v309
        %v311 = vpop.xlane.xlu0 %310
        %v313 = vlaneseq
        %v314 = vshrl.u32 %v313, 7
        %v315 = vsub.s32 0, %v314
        %v316 = vrot.slane %v311, %v315
        %v317 = vlaneseq
        %v318 = vshrl.u32 %v317, 7
        %v319 = vsub.s32 1, %v318
        %v320 = vrot.slane %v311, %v319
        %v321 = vlaneseq
        %v322 = vshrl.u32 %v321, 7
        %v323 = vsub.s32 2, %v322
        %v324 = vrot.slane %v311, %v323
        %v325 = vlaneseq
        %v326 = vshrl.u32 %v325, 7
        %v327 = vsub.s32 3, %v326
        %v328 = vrot.slane %v311, %v327
        %v329 = vcombine.low %v316, %v320
        %v330 = vcombine.low %v324, %v328
        %v332 = vunpack.c.l.s4 1966171168
        %v333 = vunpack.c.0.s8 %v332
        %v334 = vlaneseq
        %v335 = vshrl.u32 %v334, 7
        %v336 = vsub.s32 %v333, %v335
        %v337 = vrot.slane %v329, %v336
        %v339 = vunpack.c.l.s4 1966171168
        %v340 = vunpack.c.0.s8 %v339
        %v341 = vlaneseq
        %v342 = vshrl.u32 %v341, 7
        %v343 = vsub.s32 %v340, %v342
        %v344 = vrot.slane %v330, %v343
        %v345 = vcombine.low %v337, %v344
        %v347 = vunpack.c.l.s4 1966171168
        %v348 = vunpack.c.0.s8 %v347
        %v349 = vlaneseq
        %v350 = vshrl.u32 %v349, 7
        %v351 = vsub.s32 %v348, %v350
        %v352 = vrot.slane %v345, %v351
        %353 = vset.pattern.permute.xlu0 0
        %354 = vperm.xlu0 %353, %v352
        %v355 = vpop.permute.xlu0 %354
        %v356 = vlaneseq
        %v357 = vand.u32 %v356, 127
        %v358 = vlaneseq
        %v359 = vshrl.u32 %v358, 7
        %v360 = vsub.s32 %v357, %v359
        %v361 = vrot.slane %v355, %v360
        %v363 = vunpack.c.l.s4 1966171168
        %v364 = vunpack.c.0.s8 %v363
        %v365 = vlaneseq
        %v366 = vshrl.u32 %v365, 7
        %v367 = vsub.s32 %v364, %v366
        %v368 = vrot.slane %v361, %v367
        %v370 = vunpack.c.l.s4 1966171168
        %v371 = vunpack.c.0.s8 %v370
        %v372 = vlaneseq
        %v373 = vshrl.u32 %v372, 7
        %v374 = vsub.s32 %v371, %v373
        %v375 = vrot.slane %v368, %v374
        %v377 = vadd.f32 %v302, %v375
        %vm378 = vcmask 24576
        %379 = vst.msk [vmem:[#allocation2] sm:$0x1] %vm378, %v377
        %v380 = vld [vmem:[#allocation3] sm:$0x1]
        %v381 = vmul.f32 %v301, %v301
        %v383 = vcombine.high %v381, %v381
        %v385 = vsel %vm306, %v381, 0.0
        %v386 = vsel %vm306, %v383, 0.0
        %v387 = vadd.f32 %v385, %v386
        %388 = vadd.xlane.f32.xlu0 %v387
        %v389 = vpop.xlane.xlu0 %388
        %v391 = vlaneseq
        %v392 = vshrl.u32 %v391, 7
        %v393 = vsub.s32 0, %v392
        %v394 = vrot.slane %v389, %v393
        %v395 = vlaneseq
        %v396 = vshrl.u32 %v395, 7
        %v397 = vsub.s32 1, %v396
        %v398 = vrot.slane %v389, %v397
        %v399 = vlaneseq
        %v400 = vshrl.u32 %v399, 7
        %v401 = vsub.s32 2, %v400
        %v402 = vrot.slane %v389, %v401
        %v403 = vlaneseq
        %v404 = vshrl.u32 %v403, 7
        %v405 = vsub.s32 3, %v404
        %v406 = vrot.slane %v389, %v405
        %v407 = vcombine.low %v394, %v398
        %v408 = vcombine.low %v402, %v406
        %v410 = vunpack.c.l.s4 1966171168
        %v411 = vunpack.c.0.s8 %v410
        %v412 = vlaneseq
        %v413 = vshrl.u32 %v412, 7
        %v414 = vsub.s32 %v411, %v413
        %v415 = vrot.slane %v407, %v414
        %v417 = vunpack.c.l.s4 1966171168
        %v418 = vunpack.c.0.s8 %v417
        %v419 = vlaneseq
        %v420 = vshrl.u32 %v419, 7
        %v421 = vsub.s32 %v418, %v420
        %v422 = vrot.slane %v408, %v421
        %v423 = vcombine.low %v415, %v422
        %v425 = vunpack.c.l.s4 1966171168
        %v426 = vunpack.c.0.s8 %v425
        %v427 = vlaneseq
        %v428 = vshrl.u32 %v427, 7
        %v429 = vsub.s32 %v426, %v428
        %v430 = vrot.slane %v423, %v429
        %431 = vset.pattern.permute.xlu0 0
        %432 = vperm.xlu0 %431, %v430
        %v433 = vpop.permute.xlu0 %432
        %v434 = vlaneseq
        %v435 = vshrl.u32 %v434, 7
        %v436 = vsub.s32 %v357, %v435
        %v437 = vrot.slane %v433, %v436
        %v439 = vunpack.c.l.s4 1966171168
        %v440 = vunpack.c.0.s8 %v439
        %v441 = vlaneseq
        %v442 = vshrl.u32 %v441, 7
        %v443 = vsub.s32 %v440, %v442
        %v444 = vrot.slane %v437, %v443
        %v446 = vunpack.c.l.s4 1966171168
        %v447 = vunpack.c.0.s8 %v446
        %v448 = vlaneseq
        %v449 = vshrl.u32 %v448, 7
        %v450 = vsub.s32 %v447, %v449
        %v451 = vrot.slane %v444, %v450
        %v453 = vadd.f32 %v380, %v451
        %454 = vst.msk [vmem:[#allocation3] sm:$0x1] %vm378, %v453
        %p455 = scmp.eq.s32.totalorder %s25, 1
        %p456 = pnand %p455, %p293
        %p457 = pneg %p456
        // Predicated region
        $region49: #{tpu_custom_call.1} parent=43 // pred_check
          _
        $region50: #{tpu_custom_call.1} parent=43 // pred_check_branch
          %459 = sbr.rel (%p456) target = $region52
        $region51: #{tpu_custom_call.1} parent=43 // pred_region
          %v460 = vld [vmem:[#allocation2] sm:$0x1]
          %v461 = vmul.f32 %v460, 0.001953125
          %v462 = vld [vmem:[#allocation3] sm:$0x1]
          %v463 = vmul.f32 %v462, 0.001953125
          %v464 = vmul.f32 %v461, %v461
          %v465 = vsub.f32 %v463, %v464
          %v466 = vadd.f32 %v465, 1e-05
          %v467 = vrsqrt.pop %v466
          %v468 = vld [vmem:[%s1] sm:$0x3]
          %v469 = vld [vmem:[%s2] sm:$0xff]
          %v470 = vld [vmem:[%s2 + $0x8] sm:$0xff]
          %v471 = vld [vmem:[%s2 + $0x10] sm:$0xff]
          %v472 = vld [vmem:[%s2 + $0x18] sm:$0xff]
          %vm473 = vcmask 261120
          %v475 = vsel %vm473, %v468, 0
          %477 = vmatprep.subr.mxu0 0.0
          %478 = vmatpush1.msra.mxu0 0.0
          %479 = vmatprep.subr.mxu0 0.0
          %480 = vmatpush1.msra.mxu0 0.0
          %481 = vmatprep.subr.mxu0 0.0
          %482 = vmatpush1.msra.mxu0 0.0
          %483 = vmatprep.subr.mxu0 0.0
          %484 = vmatpush1.msra.mxu0 0.0
          %485 = vmatprep.subr.mxu0 0.0
          %486 = vmatpush1.msra.mxu0 0.0
          %487 = vmatprep.subr.mxu0 0.0
          %488 = vmatpush1.msra.mxu0 0.0
          %489 = vmatprep.subr.mxu0 0.0
          %490 = vmatpush1.msra.mxu0 0.0
          %491 = vmatprep.subr.mxu0 0.0
          %492 = vmatpush1.msra.mxu0 0.0
          %493 = vmatprep.subr.mxu0 0.0
          %494 = vmatpush1.msra.mxu0 0.0
          %495 = vmatprep.subr.mxu0 0.0
          %496 = vmatpush1.msra.mxu0 0.0
          %497 = vmatprep.subr.mxu0 0.0
          %498 = vmatpush1.msra.mxu0 0.0
          %499 = vmatprep.subr.mxu0 0.0
          %500 = vmatpush1.msra.mxu0 0.0
          %501 = vmatprep.subr.mxu0 0.0
          %502 = vmatpush1.msra.mxu0 %v472
          %503 = vmatprep.subr.mxu0 0.0
          %504 = vmatpush1.msra.mxu0 %v471
          %505 = vmatprep.subr.mxu0 0.0
          %506 = vmatpush1.msra.mxu0 %v470
          %507 = vmatprep.subr.mxu0 0.0
          %508 = vmatpush1.msra.mxu0 %v469
          %509 = vmatprep.subr.mxu0 0.0
          %510 = vmatpush2.msra.mxu0 0.0
          %511 = vmatprep.subr.mxu0 0.0
          %512 = vmatpush2.msra.mxu0 0.0
          %513 = vmatprep.subr.mxu0 0.0
          %514 = vmatpush2.msra.mxu0 0.0
          %515 = vmatprep.subr.mxu0 0.0
          %516 = vmatpush2.msra.mxu0 0.0
          %517 = vmatprep.subr.mxu0 0.0
          %518 = vmatpush2.msra.mxu0 0.0
          %519 = vmatprep.subr.mxu0 0.0
          %520 = vmatpush2.msra.mxu0 0.0
          %521 = vmatprep.subr.mxu0 0.0
          %522 = vmatpush2.msra.mxu0 0.0
          %523 = vmatprep.subr.mxu0 0.0
          %524 = vmatpush2.msra.mxu0 0.0
          %525 = vmatprep.subr.mxu0 0.0
          %526 = vmatpush2.msra.mxu0 0.0
          %527 = vmatprep.subr.mxu0 0.0
          %528 = vmatpush2.msra.mxu0 0.0
          %529 = vmatprep.subr.mxu0 0.0
          %530 = vmatpush2.msra.mxu0 0.0
          %531 = vmatprep.subr.mxu0 0.0
          %532 = vmatpush2.msra.mxu0 0.0
          %533 = vmatprep.subr.mxu0 0.0
          %534 = vmatpush2.msra.mxu0 0.0
          %535 = vmatprep.subr.mxu0 0.0
          %536 = vmatpush2.msra.mxu0 0.0
          %537 = vmatprep.subr.mxu0 0.0
          %538 = vmatpush2.msra.mxu0 0.0
          %539 = vmatprep.subr.mxu0 0.0
          %540 = vmatpush2.msra.mxu0 0.0
          %541 = vmatprep.mubr.f32.mxu0 0.0
          %542 = vmatmul.mubr.f32.gmra.mxu0 %v475
          %v543 = vpop.f32.mrf.mxu0
          %v544 = vadd.f32 1.0, %v543
          %v545 = vpop.f32.mrf.mxu0
          %546 = vdwg.mxu0
          %v547 = vld [vmem:[%s3] sm:$0x1]
          %v549 = vlaneseq
          %v550 = vshrl.u32 %v549, 7
          %v551 = vsub.s32 0, %v550
          %v552 = vrot.slane %v547, %v551
          %v554 = vadd.f32 %v544, %v552
          %v555 = vld [vmem:[%s4] sm:$0xff]
          %v556 = vld [vmem:[%s4 + $0x8] sm:$0xff]
          %v557 = vld [vmem:[%s4 + $0x10] sm:$0xff]
          %v558 = vld [vmem:[%s4 + $0x18] sm:$0xff]
          %v559 = vld [vmem:[%s5] sm:$0x1]
          %v561 = vlaneseq
          %v562 = vshrl.u32 %v561, 7
          %v563 = vsub.s32 0, %v562
          %v564 = vrot.slane %v559, %v563
          %566 = vmatprep.subr.mxu0 0.0
          %567 = vmatpush1.msra.mxu0 0.0
          %568 = vmatprep.subr.mxu0 0.0
          %569 = vmatpush1.msra.mxu0 0.0
          %570 = vmatprep.subr.mxu0 0.0
          %571 = vmatpush1.msra.mxu0 0.0
          %572 = vmatprep.subr.mxu0 0.0
          %573 = vmatpush1.msra.mxu0 0.0
          %574 = vmatprep.subr.mxu0 0.0
          %575 = vmatpush1.msra.mxu0 0.0
          %576 = vmatprep.subr.mxu0 0.0
          %577 = vmatpush1.msra.mxu0 0.0
          %578 = vmatprep.subr.mxu0 0.0
          %579 = vmatpush1.msra.mxu0 0.0
          %580 = vmatprep.subr.mxu0 0.0
          %581 = vmatpush1.msra.mxu0 0.0
          %582 = vmatprep.subr.mxu0 0.0
          %583 = vmatpush1.msra.mxu0 0.0
          %584 = vmatprep.subr.mxu0 0.0
          %585 = vmatpush1.msra.mxu0 0.0
          %586 = vmatprep.subr.mxu0 0.0
          %587 = vmatpush1.msra.mxu0 0.0
          %588 = vmatprep.subr.mxu0 0.0
          %589 = vmatpush1.msra.mxu0 0.0
          %590 = vmatprep.subr.mxu0 0.0
          %591 = vmatpush1.msra.mxu0 %v558
          %592 = vmatprep.subr.mxu0 0.0
          %593 = vmatpush1.msra.mxu0 %v557
          %594 = vmatprep.subr.mxu0 0.0
          %595 = vmatpush1.msra.mxu0 %v556
          %596 = vmatprep.subr.mxu0 0.0
          %597 = vmatpush1.msra.mxu0 %v555
          %598 = vmatprep.subr.mxu0 0.0
          %599 = vmatpush2.msra.mxu0 0.0
          %600 = vmatprep.subr.mxu0 0.0
          %601 = vmatpush2.msra.mxu0 0.0
          %602 = vmatprep.subr.mxu0 0.0
          %603 = vmatpush2.msra.mxu0 0.0
          %604 = vmatprep.subr.mxu0 0.0
          %605 = vmatpush2.msra.mxu0 0.0
          %606 = vmatprep.subr.mxu0 0.0
          %607 = vmatpush2.msra.mxu0 0.0
          %608 = vmatprep.subr.mxu0 0.0
          %609 = vmatpush2.msra.mxu0 0.0
          %610 = vmatprep.subr.mxu0 0.0
          %611 = vmatpush2.msra.mxu0 0.0
          %612 = vmatprep.subr.mxu0 0.0
          %613 = vmatpush2.msra.mxu0 0.0
          %614 = vmatprep.subr.mxu0 0.0
          %615 = vmatpush2.msra.mxu0 0.0
          %616 = vmatprep.subr.mxu0 0.0
          %617 = vmatpush2.msra.mxu0 0.0
          %618 = vmatprep.subr.mxu0 0.0
          %619 = vmatpush2.msra.mxu0 0.0
          %620 = vmatprep.subr.mxu0 0.0
          %621 = vmatpush2.msra.mxu0 0.0
          %622 = vmatprep.subr.mxu0 0.0
          %623 = vmatpush2.msra.mxu0 0.0
          %624 = vmatprep.subr.mxu0 0.0
          %625 = vmatpush2.msra.mxu0 0.0
          %626 = vmatprep.subr.mxu0 0.0
          %627 = vmatpush2.msra.mxu0 0.0
          %628 = vmatprep.subr.mxu0 0.0
          %629 = vmatpush2.msra.mxu0 0.0
          %630 = vmatprep.mubr.f32.mxu0 0.0
          %631 = vmatmul.mubr.f32.gmra.mxu0 %v475
          %v632 = vpop.f32.mrf.mxu0
          %v633 = vadd.f32 %v564, %v632
          %v634 = vpop.f32.mrf.mxu0
          %635 = vdwg.mxu0
          %v637 = vlaneseq
          %v638 = vshrl.u32 %v637, 7
          %v639 = vsub.s32 0, %v638
          %v640 = vrot.slane %v467, %v639
          %v642 = vmul.f32 %v640, %v554
          %v644 = vlaneseq
          %v645 = vshrl.u32 %v644, 7
          %v646 = vsub.s32 0, %v645
          %v647 = vrot.slane %v461, %v646
          %v649 = vmul.f32 %v647, %v642
          %v650 = vsub.f32 %v633, %v649
          %vm651 = vcmask 25600
          %652 = vst.msk [vmem:[#allocation4] sm:$0x3] %vm651, %v642
          %653 = vst.msk [vmem:[#allocation6] sm:$0x3] %vm651, %v650
        $region52: #{tpu_custom_call.1} parent=43 // pred_fallthru
          _
        // Predicated region
        $region53: #{tpu_custom_call.1} parent=43 // pred_check
          %p654 = pneg %p179
        $region54: #{tpu_custom_call.1} parent=43 // pred_check_branch
          %656 = sbr.rel (%p654) target = $region56
        $region55: #{tpu_custom_call.1} parent=43 // pred_region
          %s658 = ssub.s32 32, 32
          %659 = vsyncadd [#allocation5], %s658
          %s661 = sshll.u32 [#allocation4], 4
          %s662 = int_to_ptr.vmem [resolvable:$true] %s661
          %664 = dma.vmem_to_hbm [thread:$0]  %s662, 32, %s6, [#allocation5]
        $region56: #{tpu_custom_call.1} parent=43 // pred_fallthru
          _
        // Predicated region
        $region57: #{tpu_custom_call.1} parent=43 // pred_check
          %p665 = pneg %p200
        $region58: #{tpu_custom_call.1} parent=43 // pred_check_branch
          %667 = sbr.rel (%p665) target = $region60
        $region59: #{tpu_custom_call.1} parent=43 // pred_region
          %s669 = ssub.s32 32, 32
          %670 = vsyncadd [#allocation7], %s669
          %s672 = sshll.u32 [#allocation6], 4
          %s673 = int_to_ptr.vmem [resolvable:$true] %s672
          %675 = dma.vmem_to_hbm [thread:$0]  %s673, 32, %s7, [#allocation7]
        $region60: #{tpu_custom_call.1} parent=43 // pred_fallthru
          _
        // Predicated region
        $region61: #{tpu_custom_call.1} parent=43 // pred_check
          %p676 = pneg %p179
        $region62: #{tpu_custom_call.1} parent=43 // pred_check_branch
          %678 = sbr.rel (%p676) target = $region64
        $region63: #{tpu_custom_call.1} parent=43 // pred_region
          %679 = dma.done [#allocation5], 32
        $region64: #{tpu_custom_call.1} parent=43 // pred_fallthru
          _
        // Predicated region
        $region65: #{tpu_custom_call.1} parent=43 // pred_check
          %p680 = pneg %p200
        $region66: #{tpu_custom_call.1} parent=43 // pred_check_branch
          %682 = sbr.rel (%p680) target = $region68
        $region67: #{tpu_custom_call.1} parent=43 // pred_region
          %683 = dma.done [#allocation7], 32
        $region68: #{tpu_custom_call.1} parent=43 // pred_fallthru
          _
      $region44: #{tpu_custom_call.1} parent=5 // pred_fallthru
        _
      %p684 = scmp.le.s32.totalorder 2, %s16
      // Predicated region
      $region69: #{tpu_custom_call.1} parent=5 // pred_check
        %p685 = pneg %p684
      $region70: #{tpu_custom_call.1} parent=5 // pred_check_branch
        %687 = sbr.rel (%p685) target = $region72
      $region71: #{tpu_custom_call.1} parent=5 // pred_region
        %s688 = ssub.s32 %s16, 2
      $region72: #{tpu_custom_call.1} parent=5 // pred_fallthru
        _
    $region6: #{tpu_custom_call.1} parent=1 // loop_footer
      %s20 = sadd.s32 1, %s16
    $region7: #{tpu_custom_call.1} parent=1 // loop_footer_branch
      %15 = sbr.rel target = $region3
    $region8: #{tpu_custom_call.1} parent=1 // loop_exit
      _
    %689 = vsyncpa [#allocation5], 1
    %s690 = scalar_lea.sflag [#allocation5], 1
    %691 = vsyncpa %s690, 1
    %692 = vsyncpa [#allocation7], 1

</llo_original>
